<compile_context>
chip_gen: v5e
topology: v5e:2x2
jax: 0.10.0
libtpu: 0.0.40
codegen_flags: <defaults>
</compile_context>

<pallas_src>
import functools

import jax
import jax.numpy as jnp
from jax import lax
from jax.experimental import pallas as pl
from jax.experimental.pallas import tpu as pltpu


def _encoder_kernel(img_ref, wc_ref, bc_ref, wfc_ref, bfc_ref, out_ref, gap_ref,
                    *, hw, no_imgnorm, use_abs, matmul_dtype):
    """Grid = (batch_tiles, spatial_tiles); spatial axis is the (arbitrary) reduction axis.

    img_ref : (TB*C, THW)  streamed image chunk (bf16/f32), lane-dense spatial axis
    wc_ref  : (C, F)       GAP->feat projection, pre-scaled by 1/HW, f32
    bc_ref  : (1, F)       f32
    wfc_ref : (F, E)       fc weight in matmul_dtype
    bfc_ref : (1, E)       f32
    out_ref : (TB, E)      f32
    gap_ref : (TB*C, 1)    f32 scratch: running spatial sums per (batch, channel) row
    """
    j = pl.program_id(1)
    n_spatial = pl.num_programs(1)

    tb = out_ref.shape[0]
    C = img_ref.shape[0] // tb
    F = wc_ref.shape[1]
    thw = img_ref.shape[1]

    x = img_ref[...]                                              # (TB*C, THW)
    if hw % thw != 0:
        # Zero the lanes past the real spatial extent in the (partial) last block.
        col = lax.broadcasted_iota(jnp.int32, x.shape, 1) + j * thw
        x = jnp.where(col < hw, x, jnp.zeros_like(x))

    # Partial GAP: per-row spatial sum of this chunk, accumulated in f32.
    part = jnp.sum(x, axis=-1, keepdims=True, dtype=jnp.float32)  # (TB*C, 1)

    @pl.when(j == 0)
    def _init():
        gap_ref[...] = jnp.zeros_like(gap_ref)

    gap_ref[...] += part

    @pl.when(j == n_spatial - 1)
    def _finalize():
        # Channel -> feat_dim projection as C VPU broadcast-FMAs.  w_cnn is pre-scaled
        # by 1/HW, so the accumulated sums are already the GAP means.
        feats = jnp.zeros((tb, F), jnp.float32) + bc_ref[...]
        for c in range(C):
            gap_c = gap_ref[pl.ds(c, tb, stride=C), :]            # (TB, 1) channel c
            feats = feats + gap_c * wc_ref[pl.ds(c, 1), :]        # (TB, F)

        # l2norm over features (EUP rsqrt).
        feats = feats * lax.rsqrt(jnp.sum(feats * feats, axis=1, keepdims=True))

        # fc: Linear(feat_dim -> embed_size), f32 accumulation on the MXU.
        emb = jnp.dot(feats.astype(matmul_dtype), wfc_ref[...],
                      preferred_element_type=jnp.float32) + bfc_ref[...]

        if not no_imgnorm:
            emb = emb * lax.rsqrt(jnp.sum(emb * emb, axis=1, keepdims=True))
        if use_abs:
            emb = jnp.abs(emb)

        out_ref[...] = emb.astype(out_ref.dtype)


def _vmem_capacity_bytes():
    try:
        return int(pltpu.get_tpu_info().vmem_capacity_bytes)
    except Exception:
        return 64 << 20            # conservative fallback: v7x per-TensorCore VMEM


def _pick_tiles(B, C, HW, E, img_itemsize, vmem_cap, batch_tile=None, spatial_tile=None):
    # Spatial tile: lane-aligned (multiple of 128) or full HW when it is already small.
    if spatial_tile is not None:
        thw = int(min(spatial_tile, HW))
    elif HW <= 2048:
        thw = HW
    else:
        thw = 2048
    if thw < HW and thw % 128 != 0:
        thw = max(128, (thw // 128) * 128)

    if batch_tile is not None:
        return int(min(batch_tile, B)), thw

    # Batch tile: largest tile whose double-buffered image + output blocks fit roughly
    # a third of VMEM (weights, scratch and compiler headroom use the rest).
    budget = max(vmem_cap // 3, 2 << 20)
    per_row = 2 * C * thw * img_itemsize + 2 * E * 4
    tb = max(1, int(budget // per_row))
    tb = min(tb, B)
    if tb >= 8:
        tb = (tb // 8) * 8                     # (TB*C) sublane-aligned for any C
        half = -(-B // 2)
        if half >= 8 and tb > half:            # keep >=2 batch steps (v7x megacore)
            tb = max(8, (half // 8) * 8)
    else:
        t = tb
        while t < min(B, 8) and (t * C) % 8 != 0:
            t += 1
        tb = t if (t * C) % 8 == 0 else B      # fall back to the full (legal) batch dim
    return tb, thw


def encoder_image_full(images, w_cnn, b_cnn, w_fc, b_fc, *,
                       no_imgnorm=False, use_abs=False,
                       batch_tile=None, spatial_tile=None,
                       image_dtype=jnp.bfloat16, matmul_dtype=jnp.bfloat16):
    """images: (B, C, H, W).  Returns (B, embed_size) float32.

    Defaults stream images / fc weights as bf16 (f32 accumulation and f32 norm math);
    pass image_dtype=matmul_dtype=jnp.float32 for a near-exact f32 path.
    """
    B, C, H, W = images.shape
    HW = H * W
    F = w_cnn.shape[1]
    E = w_fc.shape[1]

    # Lane-dense, padding-free image layout (free reshape: no data movement).
    images_flat = images.reshape(B * C, HW)
    if images_flat.dtype != image_dtype:
        images_flat = images_flat.astype(image_dtype)

    # Pre-scale the GAP projection by 1/HW so the kernel only needs spatial sums.
    w_cnn_s = w_cnn.astype(jnp.float32) / float(HW)               # tiny: keep f32
    w_fc_c = w_fc.astype(matmul_dtype)                            # big: matmul_dtype
    b_cnn_f = b_cnn.astype(jnp.float32).reshape(1, F)
    b_fc_f = b_fc.astype(jnp.float32).reshape(1, E)

    img_itemsize = jnp.dtype(image_dtype).itemsize
    w_itemsize = jnp.dtype(matmul_dtype).itemsize
    vmem_cap = _vmem_capacity_bytes()
    tb, thw = _pick_tiles(B, C, HW, E, img_itemsize, vmem_cap,
                          batch_tile=batch_tile, spatial_tile=spatial_tile)
    nb = pl.cdiv(B, tb)
    ns = pl.cdiv(HW, thw)

    # Actual block footprint (double-buffered streams + resident weights + scratch).
    block_bytes = (2 * tb * C * thw * img_itemsize      # image stream (2 buffers)
                   + 2 * tb * E * 4                     # output stream (2 buffers)
                   + C * F * 4 + F * E * w_itemsize     # resident weights
                   + 8 * (F + E) * 4                    # biases (sublane-padded)
                   + tb * C * 128 * 4)                  # gap scratch (lane-padded)
    cap_limit = max(min(vmem_cap - (8 << 20), 100 << 20), 16 << 20)
    vmem_limit = int(min(max(block_bytes + (4 << 20), 16 << 20), cap_limit))

    kernel = functools.partial(_encoder_kernel, hw=HW,
                               no_imgnorm=no_imgnorm, use_abs=use_abs,
                               matmul_dtype=matmul_dtype)

    cost = pl.CostEstimate(
        flops=int(2 * B * (C * HW + C * F + F * E)),
        transcendentals=int(2 * B),
        bytes_accessed=int(B * C * HW * img_itemsize + B * E * 4
                           + C * F * 4 + F * E * w_itemsize))

    return pl.pallas_call(
        kernel,
        out_shape=jax.ShapeDtypeStruct((B, E), jnp.float32),
        grid_spec=pltpu.PrefetchScalarGridSpec(
            num_scalar_prefetch=0,
            grid=(nb, ns),
            in_specs=[
                # image stream: (TB*C, THW) blocks, batch-major rows, lane-dense spatial
                pl.BlockSpec((tb * C, thw), lambda i, j: (i, j)),
                # weights / biases: constant index maps -> resident across grid steps
                pl.BlockSpec((C, F), lambda i, j: (0, 0)),
                pl.BlockSpec((1, F), lambda i, j: (0, 0)),
                pl.BlockSpec((F, E), lambda i, j: (0, 0)),
                pl.BlockSpec((1, E), lambda i, j: (0, 0)),
            ],
            out_specs=pl.BlockSpec((tb, E), lambda i, j: (i, 0)),
            scratch_shapes=[pltpu.VMEM((tb * C, 1), jnp.float32)],
        ),
        compiler_params=pltpu.CompilerParams(
            dimension_semantics=("parallel", "arbitrary"),
            vmem_limit_bytes=vmem_limit),
        cost_estimate=cost,
    )(images_flat, w_cnn_s, b_cnn_f, w_fc_c, b_fc_f)


def _reference(images, w_cnn, b_cnn, w_fc, b_fc, *, no_imgnorm=False, use_abs=False):
    gap = jnp.mean(images.astype(jnp.float32), axis=(2, 3))
    feats = jnp.dot(gap, w_cnn, precision=lax.Precision.HIGHEST) + b_cnn
    feats = feats / jnp.sqrt(jnp.sum(feats ** 2, axis=1, keepdims=True))
    emb = jnp.dot(feats, w_fc, precision=lax.Precision.HIGHEST) + b_fc
    if not no_imgnorm:
        emb = emb / jnp.sqrt(jnp.sum(emb ** 2, axis=1, keepdims=True))
    if use_abs:
        emb = jnp.abs(emb)
    return emb


if __name__ == "__main__":
    # Small shapes consistent with the module (stand-ins for 3x224x224 / 2048 / 256).
    B, C, H, W = 2, 4, 16, 16
    FEAT_DIM = 128      # stand-in for resnet50 fc.in_features (2048)
    EMBED_SIZE = 128    # stand-in for embed_size (256); lane-dense output

    key = jax.random.PRNGKey(0)
    k_img, k_wc, k_wfc = jax.random.split(key, 3)

    images = jax.random.normal(k_img, (B, C, H, W), dtype=jnp.float32)

    # Synthetic backbone projection weights (deterministic).
    w_cnn = jax.random.normal(k_wc, (C, FEAT_DIM), dtype=jnp.float32) * 0.1
    b_cnn = jnp.zeros((1, FEAT_DIM), dtype=jnp.float32)

    # fc: Xavier-uniform init as in init_weights(), bias = 0.
    r = jnp.sqrt(6.0) / jnp.sqrt(float(FEAT_DIM + EMBED_SIZE))
    w_fc = jax.random.uniform(k_wfc, (FEAT_DIM, EMBED_SIZE),
                              dtype=jnp.float32, minval=-r, maxval=r)
    b_fc = jnp.zeros((1, EMBED_SIZE), dtype=jnp.float32)

    # Run 1: exact f32 path, forced 2-step spatial reduction grid (tight check).
    out = encoder_image_full(images, w_cnn, b_cnn, w_fc, b_fc,
                             no_imgnorm=False, use_abs=False,
                             batch_tile=2, spatial_tile=128,
                             image_dtype=jnp.float32, matmul_dtype=jnp.float32)
    jax.block_until_ready(out)
    ref = _reference(images, w_cnn, b_cnn, w_fc, b_fc,
                     no_imgnorm=False, use_abs=False)
    assert out.shape == (B, EMBED_SIZE)
    assert jnp.allclose(out, ref, atol=5e-4, rtol=5e-4), "f32 path mismatch"

    # Run 2: production path (bf16 image stream + bf16 fc operands), flag variant.
    out2 = encoder_image_full(images, w_cnn, b_cnn, w_fc, b_fc,
                              no_imgnorm=True, use_abs=True)
    jax.block_until_ready(out2)
    ref2 = _reference(images, w_cnn, b_cnn, w_fc, b_fc,
                      no_imgnorm=True, use_abs=True)
    assert jnp.allclose(out2, ref2, atol=3e-2, rtol=3e-2), "bf16 path mismatch"

    print("KERNEL_OK")
</pallas_src>

<mosaic_0001>
module attributes {stable_mosaic.version = 11 : i64} {
  func.func @_encoder_kernel(%arg0: i32, %arg1: i32, %arg2: memref<8x128xf32, #tpu.memory_space<vmem>>, %arg3: memref<4x128xf32, #tpu.memory_space<vmem>>, %arg4: memref<1x128xf32, #tpu.memory_space<vmem>>, %arg5: memref<128x128xf32, #tpu.memory_space<vmem>>, %arg6: memref<1x128xf32, #tpu.memory_space<vmem>>, %arg7: memref<2x128xf32, #tpu.memory_space<vmem>>, %arg8: memref<8x1xf32, #tpu.memory_space<vmem>>) attributes {dimension_semantics = [#tpu.dimension_semantics<parallel>, #tpu.dimension_semantics<arbitrary>], iteration_bounds = array<i64: 1, 2>, scalar_prefetch = 0 : i64, scratch_operands = 1 : i64, tpu.core_type = #tpu.core_type<tc>, window_params = [{transform_indices = @transform_0, window_bounds = array<i64: 8, 128>}, {pipeline_mode = #tpu.pipeline_mode<synchronous>, transform_indices = @transform_1, window_bounds = array<i64: 4, 128>}, {pipeline_mode = #tpu.pipeline_mode<synchronous>, transform_indices = @transform_2, window_bounds = array<i64: 1, 128>}, {pipeline_mode = #tpu.pipeline_mode<synchronous>, transform_indices = @transform_3, window_bounds = array<i64: 128, 128>}, {pipeline_mode = #tpu.pipeline_mode<synchronous>, transform_indices = @transform_4, window_bounds = array<i64: 1, 128>}, {transform_indices = @transform_5, window_bounds = array<i64: 2, 128>}]} {
    %c0 = arith.constant 0 : index
    %c0_0 = arith.constant 0 : index
    %0 = vector.load %arg2[%c0, %c0_0] : memref<8x128xf32, #tpu.memory_space<vmem>>, vector<8x128xf32>
    %cst = arith.constant dense<0.000000e+00> : vector<8xf32>
    %1 = vector.multi_reduction <add>, %0, %cst [1] : vector<8x128xf32> to vector<8xf32>
    %2 = vector.shape_cast %1 : vector<8xf32> to vector<8x1xf32>
    %c0_i32 = arith.constant 0 : i32
    %3 = arith.cmpi eq, %arg1, %c0_i32 : i32
    %4 = arith.extui %3 : i1 to i32
    %c0_i32_1 = arith.constant 0 : i32
    %5 = arith.cmpi ne, %4, %c0_i32_1 : i32
    scf.if %5 {
      %cst_7 = arith.constant 0.000000e+00 : f32
      %12 = vector.broadcast %cst_7 : f32 to vector<8x1xf32>
      %c0_8 = arith.constant 0 : index
      %c0_9 = arith.constant 0 : index
      %13 = vector.load %arg8[%c0_8, %c0_9] : memref<8x1xf32, #tpu.memory_space<vmem>>, vector<8x1xf32>
      tpu.vector_store %arg8[%c0_8, %c0_9], %12 {strides = array<i32>} : memref<8x1xf32, #tpu.memory_space<vmem>>, vector<8x1xf32>,
    } else {
    }
    %c0_2 = arith.constant 0 : index
    %c0_3 = arith.constant 0 : index
    %6 = vector.load %arg8[%c0_2, %c0_3] : memref<8x1xf32, #tpu.memory_space<vmem>>, vector<8x1xf32>
    %7 = arith.addf %6, %2 : vector<8x1xf32>
    %c0_4 = arith.constant 0 : index
    %c0_5 = arith.constant 0 : index
    %8 = vector.load %arg8[%c0_4, %c0_5] : memref<8x1xf32, #tpu.memory_space<vmem>>, vector<8x1xf32>
    tpu.vector_store %arg8[%c0_4, %c0_5], %7 {strides = array<i32>} : memref<8x1xf32, #tpu.memory_space<vmem>>, vector<8x1xf32>,
    %c1_i32 = arith.constant 1 : i32
    %9 = arith.cmpi eq, %arg1, %c1_i32 : i32
    %10 = arith.extui %9 : i1 to i32
    %c0_i32_6 = arith.constant 0 : i32
    %11 = arith.cmpi ne, %10, %c0_i32_6 : i32
    scf.if %11 {
      %cst_7 = arith.constant 0.000000e+00 : f32
      %12 = vector.broadcast %cst_7 : f32 to vector<2x128xf32>
      %c0_8 = arith.constant 0 : index
      %c0_9 = arith.constant 0 : index
      %13 = vector.load %arg4[%c0_8, %c0_9] : memref<1x128xf32, #tpu.memory_space<vmem>>, vector<1x128xf32>
      %14 = vector.broadcast %13 : vector<1x128xf32> to vector<2x128xf32>
      %15 = arith.addf %12, %14 : vector<2x128xf32>
      %c0_10 = arith.constant 0 : index
      %c0_11 = arith.constant 0 : index
      %16 = tpu.strided_load %arg8[%c0_10, %c0_11] {strides = array<i32: 4, 1>} : memref<8x1xf32, #tpu.memory_space<vmem>>, vector<2x1xf32>
      %c0_12 = arith.constant 0 : index
      %c0_13 = arith.constant 0 : index
      %17 = vector.load %arg3[%c0_12, %c0_13] : memref<4x128xf32, #tpu.memory_space<vmem>>, vector<1x128xf32>
      %18 = vector.broadcast %16 : vector<2x1xf32> to vector<2x128xf32>
      %19 = vector.broadcast %17 : vector<1x128xf32> to vector<2x128xf32>
      %20 = arith.mulf %18, %19 : vector<2x128xf32>
      %21 = arith.addf %15, %20 : vector<2x128xf32>
      %c1 = arith.constant 1 : index
      %c0_14 = arith.constant 0 : index
      %22 = tpu.strided_load %arg8[%c1, %c0_14] {strides = array<i32: 4, 1>} : memref<8x1xf32, #tpu.memory_space<vmem>>, vector<2x1xf32>
      %c1_15 = arith.constant 1 : index
      %c0_16 = arith.constant 0 : index
      %23 = vector.load %arg3[%c1_15, %c0_16] : memref<4x128xf32, #tpu.memory_space<vmem>>, vector<1x128xf32>
      %24 = vector.broadcast %22 : vector<2x1xf32> to vector<2x128xf32>
      %25 = vector.broadcast %23 : vector<1x128xf32> to vector<2x128xf32>
      %26 = arith.mulf %24, %25 : vector<2x128xf32>
      %27 = arith.addf %21, %26 : vector<2x128xf32>
      %c2 = arith.constant 2 : index
      %c0_17 = arith.constant 0 : index
      %28 = tpu.strided_load %arg8[%c2, %c0_17] {strides = array<i32: 4, 1>} : memref<8x1xf32, #tpu.memory_space<vmem>>, vector<2x1xf32>
      %c2_18 = arith.constant 2 : index
      %c0_19 = arith.constant 0 : index
      %29 = vector.load %arg3[%c2_18, %c0_19] : memref<4x128xf32, #tpu.memory_space<vmem>>, vector<1x128xf32>
      %30 = vector.broadcast %28 : vector<2x1xf32> to vector<2x128xf32>
      %31 = vector.broadcast %29 : vector<1x128xf32> to vector<2x128xf32>
      %32 = arith.mulf %30, %31 : vector<2x128xf32>
      %33 = arith.addf %27, %32 : vector<2x128xf32>
      %c3 = arith.constant 3 : index
      %c0_20 = arith.constant 0 : index
      %34 = tpu.strided_load %arg8[%c3, %c0_20] {strides = array<i32: 4, 1>} : memref<8x1xf32, #tpu.memory_space<vmem>>, vector<2x1xf32>
      %c3_21 = arith.constant 3 : index
      %c0_22 = arith.constant 0 : index
      %35 = vector.load %arg3[%c3_21, %c0_22] : memref<4x128xf32, #tpu.memory_space<vmem>>, vector<1x128xf32>
      %36 = vector.broadcast %34 : vector<2x1xf32> to vector<2x128xf32>
      %37 = vector.broadcast %35 : vector<1x128xf32> to vector<2x128xf32>
      %38 = arith.mulf %36, %37 : vector<2x128xf32>
      %39 = arith.addf %33, %38 : vector<2x128xf32>
      %40 = arith.mulf %39, %39 : vector<2x128xf32>
      %cst_23 = arith.constant dense<0.000000e+00> : vector<2xf32>
      %41 = vector.multi_reduction <add>, %40, %cst_23 [1] : vector<2x128xf32> to vector<2xf32>
      %42 = vector.shape_cast %41 : vector<2xf32> to vector<2x1xf32>
      %43 = math.rsqrt %42 : vector<2x1xf32>
      %44 = vector.broadcast %43 : vector<2x1xf32> to vector<2x128xf32>
      %45 = arith.mulf %39, %44 : vector<2x128xf32>
      %c0_24 = arith.constant 0 : index
      %c0_25 = arith.constant 0 : index
      %46 = vector.load %arg5[%c0_24, %c0_25] : memref<128x128xf32, #tpu.memory_space<vmem>>, vector<128x128xf32>
      %cst_26 = arith.constant dense<0.000000e+00> : vector<2x128xf32>
      %47 = tpu.matmul %45, %46, %cst_26 {dimension_numbers = #tpu.dot_dimension_numbers<[1], [0], [0], [1], [0, 0, 1, 1], [], []>} : vector<2x128xf32>, vector<128x128xf32>, vector<2x128xf32> -> vector<2x128xf32>
      %c0_27 = arith.constant 0 : index
      %c0_28 = arith.constant 0 : index
      %48 = vector.load %arg6[%c0_27, %c0_28] : memref<1x128xf32, #tpu.memory_space<vmem>>, vector<1x128xf32>
      %49 = vector.broadcast %48 : vector<1x128xf32> to vector<2x128xf32>
      %50 = arith.addf %47, %49 : vector<2x128xf32>
      %51 = arith.mulf %50, %50 : vector<2x128xf32>
      %cst_29 = arith.constant dense<0.000000e+00> : vector<2xf32>
      %52 = vector.multi_reduction <add>, %51, %cst_29 [1] : vector<2x128xf32> to vector<2xf32>
      %53 = vector.shape_cast %52 : vector<2xf32> to vector<2x1xf32>
      %54 = math.rsqrt %53 : vector<2x1xf32>
      %55 = vector.broadcast %54 : vector<2x1xf32> to vector<2x128xf32>
      %56 = arith.mulf %50, %55 : vector<2x128xf32>
      %c0_30 = arith.constant 0 : index
      %c0_31 = arith.constant 0 : index
      %57 = vector.load %arg7[%c0_30, %c0_31] : memref<2x128xf32, #tpu.memory_space<vmem>>, vector<2x128xf32>
      tpu.vector_store %arg7[%c0_30, %c0_31], %56 {strides = array<i32>} : memref<2x128xf32, #tpu.memory_space<vmem>>, vector<2x128xf32>,
    } else {
    }
    return
  }
  func.func @transform_0(%arg0: i32, %arg1: i32) -> (i32, i32) {
    %c0_i32 = arith.constant 0 : i32
    return %arg0, %arg1 : i32, i32
  }
  func.func @transform_1(%arg0: i32, %arg1: i32) -> (i32, i32) {
    %c0_i32 = arith.constant 0 : i32
    %c0_i32_0 = arith.constant 0 : i32
    %c0_i32_1 = arith.constant 0 : i32
    return %c0_i32, %c0_i32_0 : i32, i32
  }
  func.func @transform_2(%arg0: i32, %arg1: i32) -> (i32, i32) {
    %c0_i32 = arith.constant 0 : i32
    %c0_i32_0 = arith.constant 0 : i32
    %c0_i32_1 = arith.constant 0 : i32
    return %c0_i32, %c0_i32_0 : i32, i32
  }
  func.func @transform_3(%arg0: i32, %arg1: i32) -> (i32, i32) {
    %c0_i32 = arith.constant 0 : i32
    %c0_i32_0 = arith.constant 0 : i32
    %c0_i32_1 = arith.constant 0 : i32
    return %c0_i32, %c0_i32_0 : i32, i32
  }
  func.func @transform_4(%arg0: i32, %arg1: i32) -> (i32, i32) {
    %c0_i32 = arith.constant 0 : i32
    %c0_i32_0 = arith.constant 0 : i32
    %c0_i32_1 = arith.constant 0 : i32
    return %c0_i32, %c0_i32_0 : i32, i32
  }
  func.func @transform_5(%arg0: i32, %arg1: i32) -> (i32, i32) {
    %c0_i32 = arith.constant 0 : i32
    %c0_i32_0 = arith.constant 0 : i32
    return %arg0, %c0_i32 : i32, i32
  }
}

</mosaic_0001>

<llo_original>
// kernel: tpu_custom_call.1
$region0: #{tpu_custom_call.1}
  #allocation0 [shape = 'u32[]', space=smem, size = 0x4, offset = 0x4, fixed_abs, tag = 'smem constant byte address 0x4 - core index']
  #allocation1 [shape = 'u32[72,128]{1,0:T(1,128)}', space=vmem, size = 0x9000, scoped, tag = 'internal scratch']
  #allocation2 [shape = 'f32[8,1]{1,0:T(8,128)}', space=vmem, size = 0x1000, scoped, tag = 'scratch operand']
  %s0 = inlined_call_operand.hbm [shape: f32[8,256], index: 0, kind: input, shape index: {}]
  %s1 = inlined_call_operand.hbm [shape: f32[4,128], index: 1, kind: input, shape index: {}]
  %s2 = inlined_call_operand.vmem [shape: f32[1,128], index: 2, kind: input, shape index: {}]
  %s3 = inlined_call_operand.hbm [shape: f32[128,128], index: 3, kind: input, shape index: {}]
  %s4 = inlined_call_operand.vmem [shape: f32[1,128], index: 4, kind: input, shape index: {}]
  %s5 = inlined_call_operand.hbm [shape: f32[2,128], index: 5, kind: output, shape index: {}]
  %s6 = sld [smem:[#allocation0]]
  $region73: #{tpu_custom_call.1} parent=0
    _
  %s8 = ssub.s32 1, %s6
  %s9 = scalar_select 0, %s8, %s6
  $region1: #{tpu_custom_call.1} parent=0
    #allocation3 [shape = 'u8[8192]{0}', space=vmem, size = 0x2000, scoped, tag = 'input window, operand 0']
    #allocation4 [shape = 's32[2]{0}', space=sflag, size = 0x8, scoped, tag = 'scoped memory for tpu_custom_call.1']
    #allocation5 [shape = 's32[2]{0}', space=sflag, size = 0x8, scoped, tag = 'scoped memory for tpu_custom_call.1']
    #allocation6 [shape = 'u8[2048]{0}', space=vmem, size = 0x800, scoped, tag = 'input window, operand 1, single buffered']
    #allocation7 [shape = 's32[1]{0}', space=sflag, size = 0x4, scoped, tag = 'scoped memory for tpu_custom_call.1']
    #allocation8 [shape = 'u8[65536]{0}', space=vmem, size = 0x10000, scoped, tag = 'input window, operand 3, single buffered']
    #allocation9 [shape = 'u8[1024]{0}', space=vmem, size = 0x400, scoped, tag = 'output window, operand 0, single buffered']
    %10 = vsyncpa [#allocation4], 0
    %s11 = scalar_lea.sflag [#allocation4], 1
    %12 = vsyncpa %s11, 0
    %13 = vsyncpa [#allocation7], 0
    %14 = vsyncpa [#allocation5], 0
    loop: start=0, step=1, limit=4
    $region2: #{tpu_custom_call.1} parent=1 // loop_pre_header
      _
    $region3: #{tpu_custom_call.1} parent=1 // loop_header
      %s16 = sphi 0, %s20
      %p17 = scmp.ge.s32.totalorder %s16, 4
      %s23 = sphi 0, %s35
      %s24 = sphi 0, %s31
      %s25 = sphi 0, %s23
      %s26 = sphi 0, %s24
      %s27 = sphi 0, %s25
      %s28 = sphi 0, %s26
      %s40 = sphi 0, %s42
      %s43 = sphi 0, %s40
      %s44 = sphi 0, %s43
      %s60 = sphi 0, %s44
      %s64 = sphi 0, %s64
      %s66 = sphi 0, %s64
      %s67 = sphi 0, %s66
      %s81 = sphi 0, %s67
      %s85 = sphi 0, %s85
      %s87 = sphi 0, %s85
      %s88 = sphi 0, %s87
      %s102 = sphi 0, %s88
      %s106 = sphi 0, %s106
      %s108 = sphi 0, %s106
      %s109 = sphi 0, %s108
      %s123 = sphi 0, %s109
      %s127 = sphi 0, %s127
      %s129 = sphi 0, %s127
      %s130 = sphi 0, %s129
      %s144 = sphi 0, %s130
      %s150 = sphi 0, %s152
      %s153 = sphi 0, %s150
      %s154 = sphi 0, %s153
      %s170 = sphi 0, %s154
    $region4: #{tpu_custom_call.1} parent=1 // loop_header_branch
      %19 = sbr.rel (%p17) target = $region8
    $region5: #{tpu_custom_call.1} parent=1 // loop_body
      %s21 = ssub.s32 %s16, 1
      %s22 = ssub.s32 %s16, 2
      %s29 = sadd.s32 1, %s24
      %p30 = scmp.ge.s32.totalorder %s29, 2
      %s31 = scalar_select %p30, 0, %s29
      %s32 = sadd.s32 1, %s23
      %s33 = scalar_select %p30, %s32, %s23
      %p34 = scmp.ge.s32.totalorder %s33, 1
      %s35 = scalar_select %p34, 0, %s33
      %s36 = ssub.s32 %s23, %s35
      %s37 = ssub.s32 %s24, %s31
      %s38 = sor.u32 %s36, %s37
      %p39 = scmp.eq.s32.totalorder %s38, 0
      %s41 = sadd.s32 %s40, 1
      %s42 = scalar_select %p39, %s40, %s41
      %p45 = pneg %p39
      %p46 = scmp.eq.s32.totalorder %s16, 1
      %p47 = por %p45, %p46
      %p48 = scmp.ne.s32.totalorder %s40, %s43
      %p49 = scmp.eq.s32.totalorder %s16, 0
      %p50 = por %p48, %p49
      %p51 = scmp.ne.s32.totalorder %s40, %s43
      %p52 = scmp.eq.s32.totalorder %s21, 1
      %p53 = por %p51, %p52
      %p54 = scmp.ne.s32.totalorder %s43, %s44
      %p55 = scmp.eq.s32.totalorder %s21, 0
      %p56 = por %p54, %p55
      %p57 = scmp.ne.s32.totalorder %s43, %s44
      %p58 = scmp.eq.s32.totalorder %s22, 1
      %p59 = por %p57, %p58
      %p61 = scmp.ne.s32.totalorder %s44, %s60
      %p62 = scmp.eq.s32.totalorder %s22, 0
      %p63 = por %p61, %p62
      %s65 = sadd.s32 %s64, 1
      %p68 = scmp.eq.s32.totalorder %s16, 1
      %p69 = scmp.ne.s32.totalorder %s64, %s66
      %p70 = scmp.eq.s32.totalorder %s16, 0
      %p71 = por %p69, %p70
      %p72 = scmp.ne.s32.totalorder %s64, %s66
      %p73 = scmp.eq.s32.totalorder %s21, 1
      %p74 = por %p72, %p73
      %p75 = scmp.ne.s32.totalorder %s66, %s67
      %p76 = scmp.eq.s32.totalorder %s21, 0
      %p77 = por %p75, %p76
      %p78 = scmp.ne.s32.totalorder %s66, %s67
      %p79 = scmp.eq.s32.totalorder %s22, 1
      %p80 = por %p78, %p79
      %p82 = scmp.ne.s32.totalorder %s67, %s81
      %p83 = scmp.eq.s32.totalorder %s22, 0
      %p84 = por %p82, %p83
      %s86 = sadd.s32 %s85, 1
      %p89 = scmp.eq.s32.totalorder %s16, 1
      %p90 = scmp.ne.s32.totalorder %s85, %s87
      %p91 = scmp.eq.s32.totalorder %s16, 0
      %p92 = por %p90, %p91
      %p93 = scmp.ne.s32.totalorder %s85, %s87
      %p94 = scmp.eq.s32.totalorder %s21, 1
      %p95 = por %p93, %p94
      %p96 = scmp.ne.s32.totalorder %s87, %s88
      %p97 = scmp.eq.s32.totalorder %s21, 0
      %p98 = por %p96, %p97
      %p99 = scmp.ne.s32.totalorder %s87, %s88
      %p100 = scmp.eq.s32.totalorder %s22, 1
      %p101 = por %p99, %p100
      %p103 = scmp.ne.s32.totalorder %s88, %s102
      %p104 = scmp.eq.s32.totalorder %s22, 0
      %p105 = por %p103, %p104
      %s107 = sadd.s32 %s106, 1
      %p110 = scmp.eq.s32.totalorder %s16, 1
      %p111 = scmp.ne.s32.totalorder %s106, %s108
      %p112 = scmp.eq.s32.totalorder %s16, 0
      %p113 = por %p111, %p112
      %p114 = scmp.ne.s32.totalorder %s106, %s108
      %p115 = scmp.eq.s32.totalorder %s21, 1
      %p116 = por %p114, %p115
      %p117 = scmp.ne.s32.totalorder %s108, %s109
      %p118 = scmp.eq.s32.totalorder %s21, 0
      %p119 = por %p117, %p118
      %p120 = scmp.ne.s32.totalorder %s108, %s109
      %p121 = scmp.eq.s32.totalorder %s22, 1
      %p122 = por %p120, %p121
      %p124 = scmp.ne.s32.totalorder %s109, %s123
      %p125 = scmp.eq.s32.totalorder %s22, 0
      %p126 = por %p124, %p125
      %s128 = sadd.s32 %s127, 1
      %p131 = scmp.eq.s32.totalorder %s16, 1
      %p132 = scmp.ne.s32.totalorder %s127, %s129
      %p133 = scmp.eq.s32.totalorder %s16, 0
      %p134 = por %p132, %p133
      %p135 = scmp.ne.s32.totalorder %s127, %s129
      %p136 = scmp.eq.s32.totalorder %s21, 1
      %p137 = por %p135, %p136
      %p138 = scmp.ne.s32.totalorder %s129, %s130
      %p139 = scmp.eq.s32.totalorder %s21, 0
      %p140 = por %p138, %p139
      %p141 = scmp.ne.s32.totalorder %s129, %s130
      %p142 = scmp.eq.s32.totalorder %s22, 1
      %p143 = por %p141, %p142
      %p145 = scmp.ne.s32.totalorder %s130, %s144
      %p146 = scmp.eq.s32.totalorder %s22, 0
      %p147 = por %p145, %p146
      %s148 = ssub.s32 %s23, %s35
      %p149 = scmp.eq.s32.totalorder %s148, 0
      %s151 = sadd.s32 %s150, 1
      %s152 = scalar_select %p149, %s150, %s151
      %p155 = pneg %p149
      %p156 = scmp.eq.s32.totalorder %s16, 1
      %p157 = por %p155, %p156
      %p158 = scmp.ne.s32.totalorder %s150, %s153
      %p159 = scmp.eq.s32.totalorder %s16, 0
      %p160 = por %p158, %p159
      %p161 = scmp.ne.s32.totalorder %s150, %s153
      %p162 = scmp.eq.s32.totalorder %s21, 1
      %p163 = por %p161, %p162
      %p164 = scmp.ne.s32.totalorder %s153, %s154
      %p165 = scmp.eq.s32.totalorder %s21, 0
      %p166 = por %p164, %p165
      %p167 = scmp.ne.s32.totalorder %s153, %s154
      %p168 = scmp.eq.s32.totalorder %s22, 1
      %p169 = por %p167, %p168
      %p171 = scmp.ne.s32.totalorder %s154, %s170
      %p172 = scmp.eq.s32.totalorder %s22, 0
      %p173 = por %p171, %p172
      %p174 = scmp.le.s32.totalorder 1, %s16
      %p175 = scmp.lt.s32.totalorder %s16, 3
      %p176 = pnand %p174, %p175
      %p177 = pneg %p176
      // Predicated region
      $region9: #{tpu_custom_call.1} parent=5 // pred_check
        _
      $region10: #{tpu_custom_call.1} parent=5 // pred_check_branch
        %179 = sbr.rel (%p176) target = $region12
      $region11: #{tpu_custom_call.1} parent=5 // pred_region
        %s180 = ssub.s32 %s16, 1
        // Predicated region
        $region13: #{tpu_custom_call.1} parent=11 // pred_check
          %p181 = pneg %p77
        $region14: #{tpu_custom_call.1} parent=11 // pred_check_branch
          %183 = sbr.rel (%p181) target = $region16
        $region15: #{tpu_custom_call.1} parent=11 // pred_region
          %185 = vsyncadd [#allocation7], 0
          %s187 = sshll.u32 %s1, 4
          %s188 = int_to_ptr.hbm [resolvable:$true] %s187
          %s189 = sshll.u32 [#allocation6], 4
          %s190 = int_to_ptr.vmem [resolvable:$true] %s189
          %192 = dma.hbm_to_vmem [thread:$0]  %s188, 64, %s190, [#allocation7]
        $region16: #{tpu_custom_call.1} parent=11 // pred_fallthru
          _
        // Predicated region
        $region17: #{tpu_custom_call.1} parent=11 // pred_check
          %p193 = pneg %p98
        $region18: #{tpu_custom_call.1} parent=11 // pred_check_branch
          %195 = sbr.rel (%p193) target = $region20
        $region19: #{tpu_custom_call.1} parent=11 // pred_region
          _
        $region20: #{tpu_custom_call.1} parent=11 // pred_fallthru
          _
        // Predicated region
        $region21: #{tpu_custom_call.1} parent=11 // pred_check
          %p196 = pneg %p119
        $region22: #{tpu_custom_call.1} parent=11 // pred_check_branch
          %198 = sbr.rel (%p196) target = $region24
        $region23: #{tpu_custom_call.1} parent=11 // pred_region
          %200 = vsyncadd [#allocation7], 0
          %s201 = sshll.u32 %s3, 4
          %s202 = int_to_ptr.hbm [resolvable:$true] %s201
          %s203 = sshll.u32 [#allocation8], 4
          %s204 = int_to_ptr.vmem [resolvable:$true] %s203
          %209 = dma.hbm_to_vmem [thread:$0]  %s202, 2048, %s204, [#allocation7], 128, 128, 8
        $region24: #{tpu_custom_call.1} parent=11 // pred_fallthru
          _
        // Predicated region
        $region25: #{tpu_custom_call.1} parent=11 // pred_check
          %p210 = pneg %p140
        $region26: #{tpu_custom_call.1} parent=11 // pred_check_branch
          %212 = sbr.rel (%p210) target = $region28
        $region27: #{tpu_custom_call.1} parent=11 // pred_region
          _
        $region28: #{tpu_custom_call.1} parent=11 // pred_fallthru
          _
      $region12: #{tpu_custom_call.1} parent=5 // pred_fallthru
        _
      %p213 = scmp.lt.s32.totalorder %s16, 2
      // Predicated region
      $region29: #{tpu_custom_call.1} parent=5 // pred_check
        %p214 = pneg %p213
      $region30: #{tpu_custom_call.1} parent=5 // pred_check_branch
        %216 = sbr.rel (%p214) target = $region32
      $region31: #{tpu_custom_call.1} parent=5 // pred_region
        // Predicated region
        $region33: #{tpu_custom_call.1} parent=31 // pred_check
          %p217 = pneg %p50
        $region34: #{tpu_custom_call.1} parent=31 // pred_check_branch
          %219 = sbr.rel (%p217) target = $region36
        $region35: #{tpu_custom_call.1} parent=31 // pred_region
          %s220 = sand.u32 %s40, 1
          %s221 = scalar_lea.sflag [#allocation4], %s220
          %s222 = sand.u32 %s40, 1
          %s223 = smul.addr %s222, 8
          %s224 = scalar_lea.vmem [#allocation3], %s223
          %226 = vsyncadd %s221, 0
          %s227 = smul.addr %s23, 2
          %s228 = sadd.s32 %s24, %s227
          %s229 = smul.addr %s228, 8
          %s230 = scalar_lea.hbm %s0, %s229
          %s232 = sshll.u32 %s230, 4
          %s233 = int_to_ptr.hbm [resolvable:$true] %s232
          %s234 = sshll.u32 %s224, 4
          %s235 = int_to_ptr.vmem [resolvable:$true] %s234
          %237 = dma.hbm_to_vmem [thread:$0]  %s233, 128, %s235, %s221
        $region36: #{tpu_custom_call.1} parent=31 // pred_fallthru
          _
      $region32: #{tpu_custom_call.1} parent=5 // pred_fallthru
        _
      %p238 = scmp.le.s32.totalorder 1, %s16
      %p239 = scmp.lt.s32.totalorder %s16, 3
      %p240 = pnand %p238, %p239
      %p241 = pneg %p240
      // Predicated region
      $region37: #{tpu_custom_call.1} parent=5 // pred_check
        _
      $region38: #{tpu_custom_call.1} parent=5 // pred_check_branch
        %243 = sbr.rel (%p240) target = $region40
      $region39: #{tpu_custom_call.1} parent=5 // pred_region
        %s244 = ssub.s32 %s16, 1
        %s245 = sand.u32 %s43, 1
        %s246 = scalar_lea.sflag [#allocation4], %s245
        %s247 = sand.u32 %s43, 1
        %s248 = smul.addr %s247, 8
        %s249 = scalar_lea.vmem [#allocation3], %s248
        // Predicated region
        $region41: #{tpu_custom_call.1} parent=39 // pred_check
          %p250 = pneg %p56
        $region42: #{tpu_custom_call.1} parent=39 // pred_check_branch
          %252 = sbr.rel (%p250) target = $region44
        $region43: #{tpu_custom_call.1} parent=39 // pred_region
          %254 = dma.done %s246, 128
        $region44: #{tpu_custom_call.1} parent=39 // pred_fallthru
          _
        // Predicated region
        $region45: #{tpu_custom_call.1} parent=39 // pred_check
          %p255 = pneg %p77
        $region46: #{tpu_custom_call.1} parent=39 // pred_check_branch
          %257 = sbr.rel (%p255) target = $region48
        $region47: #{tpu_custom_call.1} parent=39 // pred_region
          %259 = dma.done [#allocation7], 64
        $region48: #{tpu_custom_call.1} parent=39 // pred_fallthru
          _
        // Predicated region
        $region49: #{tpu_custom_call.1} parent=39 // pred_check
          %p260 = pneg %p119
        $region50: #{tpu_custom_call.1} parent=39 // pred_check_branch
          %262 = sbr.rel (%p260) target = $region52
        $region51: #{tpu_custom_call.1} parent=39 // pred_region
          %264 = dma.done [#allocation7], 2048
        $region52: #{tpu_custom_call.1} parent=39 // pred_fallthru
          _
        %s265 = sand.u32 %s43, 1
        %s266 = scalar_lea.sflag [#allocation4], %s265
        %s267 = sand.u32 %s43, 1
        %s268 = smul.addr %s267, 8
        %s269 = scalar_lea.vmem [#allocation3], %s268
        %p270 = pneg %p56
        %p271 = pneg %p53
        %p272 = pneg %p77
        %p273 = pneg %p74
        %p274 = pneg %p98
        %p275 = pneg %p95
        %p276 = pneg %p119
        %p277 = pneg %p116
        %p278 = pneg %p140
        %p279 = pneg %p137
        %p280 = pneg %p166
        %p281 = pneg %p163
        %v282 = vld [vmem:[%s249] sm:$0xff]
        %283 = vadd.xlane.f32.xlu0 %v282
        %v284 = vpop.xlane.xlu0 %283
        %p285 = scmp.eq.s32.totalorder %s26, 0
        // Predicated region
        $region53: #{tpu_custom_call.1} parent=39 // pred_check
          %p286 = pneg %p285
        $region54: #{tpu_custom_call.1} parent=39 // pred_check_branch
          %288 = sbr.rel (%p286) target = $region56
        $region55: #{tpu_custom_call.1} parent=39 // pred_region
          %vm289 = vcmask 7168
          %290 = vst.msk [vmem:[#allocation2] sm:$0xff] %vm289, 0.0
        $region56: #{tpu_custom_call.1} parent=39 // pred_fallthru
          _
        %v291 = vld [vmem:[#allocation2] sm:$0xff]
        %v292 = vadd.f32 %v291, %v284
        %vm293 = vcmask 7168
        %294 = vst.msk [vmem:[#allocation2] sm:$0xff] %vm293, %v292
        %p295 = scmp.eq.s32.totalorder %s26, 1
        // Predicated region
        $region57: #{tpu_custom_call.1} parent=39 // pred_check
          %p296 = pneg %p295
        $region58: #{tpu_custom_call.1} parent=39 // pred_check_branch
          %298 = sbr.rel (%p296) target = $region60
        $region59: #{tpu_custom_call.1} parent=39 // pred_region
          %v299 = vld [vmem:[%s2] sm:$0x1]
          %v301 = vperm.slane %v299, 0
          %v303 = vadd.f32 %v301, 0.0
          %v304 = vld [vmem:[#allocation2] ss:$4 sm:$0x3]
          %v305 = vld [vmem:[#allocation6] sm:$0x1]
          %307 = vset.pattern.permute.xlu0 0
          %308 = vperm.xlu0 %307, %v304
          %v309 = vpop.permute.xlu0 %308
          %v311 = vperm.slane %v305, 0
          %v312 = vmul.f32 %v309, %v311
          %v313 = vadd.f32 %v303, %v312
          %s314 = scalar_lea.vmem [#allocation2], 1
          %v315 = vld [vmem:[%s314] ss:$4 sm:$0x3]
          %v316 = vld [vmem:[#allocation6 + $0x1] sm:$0x1]
          %318 = vset.pattern.permute.xlu0 0
          %319 = vperm.xlu0 %318, %v315
          %v320 = vpop.permute.xlu0 %319
          %v322 = vperm.slane %v316, 0
          %v323 = vmul.f32 %v320, %v322
          %v324 = vadd.f32 %v313, %v323
          %s325 = scalar_lea.vmem [#allocation2], 2
          %v326 = vld [vmem:[%s325] ss:$4 sm:$0x3]
          %v327 = vld [vmem:[#allocation6 + $0x2] sm:$0x1]
          %329 = vset.pattern.permute.xlu0 0
          %330 = vperm.xlu0 %329, %v326
          %v331 = vpop.permute.xlu0 %330
          %v333 = vperm.slane %v327, 0
          %v334 = vmul.f32 %v331, %v333
          %v335 = vadd.f32 %v324, %v334
          %s336 = scalar_lea.vmem [#allocation2], 3
          %v337 = vld [vmem:[%s336] ss:$4 sm:$0x3]
          %v338 = vld [vmem:[#allocation6 + $0x3] sm:$0x1]
          %340 = vset.pattern.permute.xlu0 0
          %341 = vperm.xlu0 %340, %v337
          %v342 = vpop.permute.xlu0 %341
          %v344 = vperm.slane %v338, 0
          %v345 = vmul.f32 %v342, %v344
          %v346 = vadd.f32 %v335, %v345
          %v347 = vmul.f32 %v346, %v346
          %vm348 = vcmask 1041408
          %v349 = vsel %vm348, %v347, 0.0
          %350 = vadd.xlane.f32.xlu0 %v349
          %v351 = vpop.xlane.xlu0 %350
          %v352 = vrsqrt.pop %v351
          %v353 = vmul.f32 %v352, %v351
          %v354 = vmul.f32 %v353, %v352
          %v355 = vmul.f32 0.5, %v354
          %v356 = vsub.f32 1.5, %v355
          %v357 = vmul.f32 %v352, %v356
          %vm358 = vweird.f32 %v351
          %vm359 = vweird.f32 %v352
          %vm360 = vmor %vm358, %vm359
          %v361 = vsel %vm360, %v352, %v357
          %v362 = vmul.f32 %v346, %v361
          %v363 = vld [vmem:[#allocation8] sm:$0xff]
          %v364 = vld [vmem:[#allocation8 + $0x8] sm:$0xff]
          %v365 = vld [vmem:[#allocation8 + $0x10] sm:$0xff]
          %v366 = vld [vmem:[#allocation8 + $0x18] sm:$0xff]
          %v367 = vld [vmem:[#allocation8 + $0x20] sm:$0xff]
          %v368 = vld [vmem:[#allocation8 + $0x28] sm:$0xff]
          %v369 = vld [vmem:[#allocation8 + $0x30] sm:$0xff]
          %v370 = vld [vmem:[#allocation8 + $0x38] sm:$0xff]
          %v371 = vld [vmem:[#allocation8 + $0x40] sm:$0xff]
          %v372 = vld [vmem:[#allocation8 + $0x48] sm:$0xff]
          %v373 = vld [vmem:[#allocation8 + $0x50] sm:$0xff]
          %v374 = vld [vmem:[#allocation8 + $0x58] sm:$0xff]
          %v375 = vld [vmem:[#allocation8 + $0x60] sm:$0xff]
          %v376 = vld [vmem:[#allocation8 + $0x68] sm:$0xff]
          %v377 = vld [vmem:[#allocation8 + $0x70] sm:$0xff]
          %v378 = vld [vmem:[#allocation8 + $0x78] sm:$0xff]
          %v379 = vld [vmem:[%s4] sm:$0x1]
          %v381 = vperm.slane %v379, 0
          %383 = vmatpush.msra.mxu0 %v378
          %384 = vmatpush.msra.mxu0 %v377
          %385 = vmatpush.msra.mxu0 %v376
          %386 = vmatpush.msra.mxu0 %v375
          %387 = vmatpush.msra.mxu0 %v374
          %388 = vmatpush.msra.mxu0 %v373
          %389 = vmatpush.msra.mxu0 %v372
          %390 = vmatpush.msra.mxu0 %v371
          %391 = vmatpush.msra.mxu0 %v370
          %392 = vmatpush.msra.mxu0 %v369
          %393 = vmatpush.msra.mxu0 %v368
          %394 = vmatpush.msra.mxu0 %v367
          %395 = vmatpush.msra.mxu0 %v366
          %396 = vmatpush.msra.mxu0 %v365
          %397 = vmatpush.msra.mxu0 %v364
          %398 = vmatpush.msra.mxu0 %v363
          %399 = vmatmul.f32.gmra.mxu0 %v362
          %v400 = vpop.f32.mrf.mxu0
          %v401 = vadd.f32 %v381, %v400
          %402 = vdwg.mxu0
          %v403 = vmul.f32 %v401, %v401
          %v404 = vsel %vm348, %v403, 0.0
          %405 = vadd.xlane.f32.xlu0 %v404
          %v406 = vpop.xlane.xlu0 %405
          %v407 = vrsqrt.pop %v406
          %v408 = vmul.f32 %v407, %v406
          %v409 = vmul.f32 %v408, %v407
          %v410 = vmul.f32 0.5, %v409
          %v411 = vsub.f32 1.5, %v410
          %v412 = vmul.f32 %v407, %v411
          %vm413 = vweird.f32 %v406
          %vm414 = vweird.f32 %v407
          %vm415 = vmor %vm413, %vm414
          %v416 = vsel %vm415, %v407, %v412
          %v417 = vmul.f32 %v401, %v416
          %418 = vst [vmem:[#allocation9] sm:$0x3] %v417
        $region60: #{tpu_custom_call.1} parent=39 // pred_fallthru
          _
        // Predicated region
        $region61: #{tpu_custom_call.1} parent=39 // pred_check
          %p419 = pneg %p163
        $region62: #{tpu_custom_call.1} parent=39 // pred_check_branch
          %421 = sbr.rel (%p419) target = $region64
        $region63: #{tpu_custom_call.1} parent=39 // pred_region
          %423 = vsyncadd [#allocation5], 0
          %s424 = smul.addr %s25, 2
          %s425 = scalar_lea.hbm %s5, %s424
          %s427 = sshll.u32 [#allocation9], 4
          %s428 = int_to_ptr.vmem [resolvable:$true] %s427
          %s429 = sshll.u32 %s425, 4
          %s430 = int_to_ptr.hbm [resolvable:$true] %s429
          %432 = dma.vmem_to_hbm [thread:$0]  %s428, 32, %s430, [#allocation5]
        $region64: #{tpu_custom_call.1} parent=39 // pred_fallthru
          _
        // Predicated region
        $region65: #{tpu_custom_call.1} parent=39 // pred_check
          %p433 = pneg %p163
        $region66: #{tpu_custom_call.1} parent=39 // pred_check_branch
          %435 = sbr.rel (%p433) target = $region68
        $region67: #{tpu_custom_call.1} parent=39 // pred_region
          %437 = dma.done [#allocation5], 32
        $region68: #{tpu_custom_call.1} parent=39 // pred_fallthru
          _
      $region40: #{tpu_custom_call.1} parent=5 // pred_fallthru
        _
      %p438 = scmp.le.s32.totalorder 2, %s16
      // Predicated region
      $region69: #{tpu_custom_call.1} parent=5 // pred_check
        %p439 = pneg %p438
      $region70: #{tpu_custom_call.1} parent=5 // pred_check_branch
        %441 = sbr.rel (%p439) target = $region72
      $region71: #{tpu_custom_call.1} parent=5 // pred_region
        %s442 = ssub.s32 %s16, 2
      $region72: #{tpu_custom_call.1} parent=5 // pred_fallthru
        _
    $region6: #{tpu_custom_call.1} parent=1 // loop_footer
      %s20 = sadd.s32 1, %s16
    $region7: #{tpu_custom_call.1} parent=1 // loop_footer_branch
      %15 = sbr.rel target = $region3
    $region8: #{tpu_custom_call.1} parent=1 // loop_exit
      _
    %443 = vsyncpa [#allocation4], 1
    %s444 = scalar_lea.sflag [#allocation4], 1
    %445 = vsyncpa %s444, 1
    %446 = vsyncpa [#allocation7], 1
    %447 = vsyncpa [#allocation5], 1
    %s448 = scalar_lea.sflag [#allocation5], 1
    %449 = vsyncpa %s448, 1

</llo_original>
